<compile_context>
chip_gen: v7x
topology: tpu7x:2x2x1
jax: 0.10.0
libtpu: 0.0.40
codegen_flags: <defaults>
</compile_context>

<pallas_src>
import functools

import jax
import jax.numpy as jnp
from jax.experimental import pallas as pl
from jax.experimental.pallas import tpu as pltpu


_CORE_SPLIT = 2  # leading "parallel" grid axis for pass 1 (uses both TCs on v7x;
                 # degenerates to a cheap sequential outer loop on v5e/v6e).


# ---------------------------------------------------------------------------
# Generation-aware VMEM budget and tile sizing.
# ---------------------------------------------------------------------------
def _vmem_budget_bytes():
    try:
        cap = int(pltpu.get_tpu_info().vmem_capacity_bytes)
    except Exception:
        cap = 64 * 2 ** 20  # conservative fallback (v7x-sized)
    # ~48 MiB on v7x (64 MiB physical), ~96 MiB on v5e/v6e (128 MiB physical).
    return max(8 * 2 ** 20, int(min(cap - 16 * 2 ** 20, int(cap * 0.75))))


def _pick_block_rows(n_rows, row_bytes, budget):
    """~6-8 MiB tiles, multiple of 8 rows, within the VMEM budget."""
    if n_rows <= 8:
        return max(int(n_rows), 1)
    target = max(512 * 1024, min(8 * 2 ** 20, budget // 8))
    t = max(8, target // max(row_bytes, 1))
    t = int(min(t, 4096, n_rows))
    t -= t % 8
    return max(t, 8)


# ---------------------------------------------------------------------------
# Fused resident-z kernel: z read from HBM exactly once; score + softmax +
# combine all in VMEM.  Used when z (plus intermediates) fits the VMEM budget.
# ---------------------------------------------------------------------------
def _fused_kernel(zf_ref, w1b_ref, b1t_ref, w2b_ref, out_ref, *,
                  n_rows, n_meta, d):
    zt = zf_ref[...]                                             # (N, M*D)
    # One full-width block-diagonal matmul for all M metapaths.
    h = jnp.tanh(jnp.dot(zt, w1b_ref[...],
                         preferred_element_type=jnp.float32) + b1t_ref[...])
    h_mean = jnp.sum(h, axis=0, keepdims=True) * jnp.float32(1.0 / n_rows)
    scores = jnp.dot(h_mean, w2b_ref[...],
                     preferred_element_type=jnp.float32)         # (1, M)
    s_max = jnp.max(scores, axis=1, keepdims=True)
    e = jnp.exp(scores - s_max)
    beta = e / jnp.sum(e, axis=1, keepdims=True)                 # (1, M)
    # Exact f32 weighted combine (per-tensor-scale style (1,1) splat broadcast).
    acc = zt[:, 0:d] * beta[0:1, 0:1]
    for mm in range(1, n_meta):
        acc = acc + zt[:, mm * d:(mm + 1) * d] * beta[0:1, mm:mm + 1]
    out_ref[...] = acc.astype(out_ref.dtype)


# ---------------------------------------------------------------------------
# Streaming pass 1: per-core partial column sums of tanh(z @ W1_blk + b1).
# Grid = (core_split, tiles_per_core); outer axis "parallel", inner "arbitrary".
# ---------------------------------------------------------------------------
def _score_kernel(zf_ref, w1b_ref, b1t_ref, psum_ref, *,
                  n_rows, block_rows, need_mask):
    i = pl.program_id(1)

    @pl.when(i == 0)
    def _init():
        psum_ref[...] = jnp.zeros_like(psum_ref)

    zt = zf_ref[...]                                             # (T, M*D)
    # Default MXU precision matched the f32 reference to 1e-5 previously; use
    # precision=HIGHEST here if strict bit-closeness is ever required.
    h = jnp.tanh(jnp.dot(zt, w1b_ref[...],
                         preferred_element_type=jnp.float32) + b1t_ref[...])

    if need_mask:
        # Only emitted when the tiling produces partial / phantom tiles.
        c = pl.program_id(0)
        ntc = pl.num_programs(1)
        g = c * ntc + i                                          # global tile id
        row_ids = g * block_rows + jax.lax.broadcasted_iota(
            jnp.int32, (block_rows, 1), 0)
        h = jnp.where(row_ids < n_rows, h, 0.0)

    psum_ref[...] += jnp.sum(h, axis=0, keepdims=True)[None]     # (1, 1, M*H)


# ---------------------------------------------------------------------------
# Streaming pass 2: out[n, :] = sum_m beta[m] * z[n, m, :], beta from SMEM.
# Exact f32 VPU math; HBM-bandwidth bound; "parallel" N-tiles.
# ---------------------------------------------------------------------------
def _combine_kernel(beta_ref, zf_ref, out_ref, *, n_meta, d):
    zt = zf_ref[...]                                             # (T, M*D)
    acc = beta_ref[0, 0] * zt[:, 0:d]
    for mm in range(1, n_meta):                                  # M is small
        acc = acc + beta_ref[mm, 0] * zt[:, mm * d:(mm + 1) * d]
    out_ref[...] = acc.astype(out_ref.dtype)


# ---------------------------------------------------------------------------
# Wrapper.
# ---------------------------------------------------------------------------
def semantic_attention(z, w1, b1, w2, *, block_rows=None, force_streaming=False):
    """z: (N, M, D); w1: (D, H); b1: (1, H); w2: (H, 1) (torch weights, (in,out))."""
    n, m_meta, d = z.shape
    d_in, hid = w1.shape
    assert d_in == d and b1.shape == (1, hid) and w2.shape == (hid, 1)
    md = m_meta * d
    mh = m_meta * hid
    itemsize = z.dtype.itemsize

    zf = z.reshape(n, md)                   # free row-major view, lane-dense rows

    # Host-built fused weights (tiny, constant):
    eye_m = jnp.eye(m_meta, dtype=w1.dtype)
    w1_blk = jnp.kron(eye_m, w1)            # (M*D, M*H) block-diagonal
    b1_t = jnp.tile(b1, (1, m_meta))        # (1, M*H)

    budget = _vmem_budget_bytes()

    # ---------------- Fused resident-z fast path ----------------
    fused_bytes = 4 * (n * (md + mh + d) + md * mh + 2 * mh + mh * m_meta)
    if (not force_streaming) and (2 * fused_bytes <= budget):
        w2_blk = jnp.kron(eye_m, w2)        # (M*H, M)
        return pl.pallas_call(
            functools.partial(_fused_kernel, n_rows=n, n_meta=m_meta, d=d),
            out_shape=jax.ShapeDtypeStruct((n, d), z.dtype),
            grid_spec=pltpu.PrefetchScalarGridSpec(
                num_scalar_prefetch=0,
                grid=(1,),
                in_specs=[
                    pl.BlockSpec((n, md), lambda i: (0, 0)),
                    pl.BlockSpec((md, mh), lambda i: (0, 0)),
                    pl.BlockSpec((1, mh), lambda i: (0, 0)),
                    pl.BlockSpec((mh, m_meta), lambda i: (0, 0)),
                ],
                out_specs=pl.BlockSpec((n, d), lambda i: (0, 0)),
            ),
            compiler_params=pltpu.CompilerParams(
                dimension_semantics=("arbitrary",),
                vmem_limit_bytes=budget),
            cost_estimate=pl.CostEstimate(
                flops=int(2 * n * md * mh + 2 * mh * m_meta + 2 * n * m_meta * d),
                transcendentals=int(n * mh + m_meta),
                bytes_accessed=int(n * md * itemsize + n * d * itemsize
                                   + (md * mh + 2 * mh + mh * m_meta) * 4)),
        )(zf, w1_blk, b1_t, w2_blk)

    # ---------------- Streaming two-pass path ----------------
    if block_rows is None:
        t = _pick_block_rows(n, md * itemsize, budget)
    else:
        t = int(min(block_rows, n))
        if 8 < t < n:
            t -= t % 8
        t = max(t, 1)
    nt = pl.cdiv(n, t)                       # total N-tiles
    ntc = pl.cdiv(nt, _CORE_SPLIT)           # tiles per core-split slice
    need_mask = (_CORE_SPLIT * ntc * t != n)  # partial or phantom tiles exist

    def _z_index(c, i):
        # Clamp phantom tiles (c*ntc+i >= nt) to the last real tile; their rows
        # are masked out inside the kernel.
        return (jnp.minimum(c * ntc + i, nt - 1), 0)

    # Pass 1: per-core partial sums of tanh(z @ W1_blk + b1) over rows.
    psum = pl.pallas_call(
        functools.partial(_score_kernel, n_rows=n, block_rows=t,
                          need_mask=need_mask),
        out_shape=jax.ShapeDtypeStruct((_CORE_SPLIT, 1, mh), jnp.float32),
        grid_spec=pltpu.PrefetchScalarGridSpec(
            num_scalar_prefetch=0,
            grid=(_CORE_SPLIT, ntc),
            in_specs=[
                pl.BlockSpec((t, md), _z_index),
                pl.BlockSpec((md, mh), lambda c, i: (0, 0)),
                pl.BlockSpec((1, mh), lambda c, i: (0, 0)),
            ],
            out_specs=pl.BlockSpec((1, 1, mh), lambda c, i: (c, 0, 0)),
        ),
        compiler_params=pltpu.CompilerParams(
            dimension_semantics=("parallel", "arbitrary"),
            vmem_limit_bytes=budget),
        cost_estimate=pl.CostEstimate(
            flops=int(2 * n * md * mh),
            transcendentals=int(n * mh),
            bytes_accessed=int(n * md * itemsize
                               + (md * mh + mh + _CORE_SPLIT * mh) * 4)),
    )(zf, w1_blk, b1_t)

    # Tiny finalize in plain JAX: mean -> second projection -> softmax over M.
    h_mean = jnp.sum(psum, axis=(0, 1)).reshape(m_meta, hid) / n
    w_score = jnp.dot(h_mean, w2, precision=jax.lax.Precision.HIGHEST)  # (M, 1)
    beta = jax.nn.softmax(w_score, axis=0)                               # (M, 1)

    # Pass 2: out = sum_m beta[m] * z[:, m, :].
    out = pl.pallas_call(
        functools.partial(_combine_kernel, n_meta=m_meta, d=d),
        out_shape=jax.ShapeDtypeStruct((n, d), z.dtype),
        grid_spec=pltpu.PrefetchScalarGridSpec(
            num_scalar_prefetch=0,
            grid=(nt,),
            in_specs=[
                pl.BlockSpec(memory_space=pltpu.MemorySpace.SMEM),  # beta scalars
                pl.BlockSpec((t, md), lambda i: (i, 0)),
            ],
            out_specs=pl.BlockSpec((t, d), lambda i: (i, 0)),
        ),
        compiler_params=pltpu.CompilerParams(
            dimension_semantics=("parallel",),
            vmem_limit_bytes=budget),
        cost_estimate=pl.CostEstimate(
            flops=int(2 * n * m_meta * d),
            transcendentals=0,
            bytes_accessed=int(n * md * itemsize + n * d * itemsize
                               + m_meta * 4)),
    )(beta, zf)
    return out


def semantic_attention_ref(z, w1, b1, w2):
    # Pure-JAX reference mirroring the PyTorch forward (full f32 precision).
    h = jnp.tanh(jnp.einsum("nmd,dh->nmh", z, w1, precision="highest")
                 + b1[None, :, :])
    s = jnp.einsum("nmh,hk->nmk", h, w2, precision="highest")   # (N, M, 1)
    w = s.mean(axis=0)                                          # (M, 1)
    beta = jax.nn.softmax(w, axis=0)                            # (M, 1)
    return jnp.sum(beta[None, :, :] * z, axis=1)                # (N, D)


if __name__ == "__main__":
    # N nodes, M metapaths, D = in_size, H = hidden_size (small demo shapes).
    N, M, D, H = 192, 4, 32, 32

    key = jax.random.PRNGKey(0)
    kz, kw1, kb1, kw2 = jax.random.split(key, 4)

    z = jax.random.normal(kz, (N, M, D), dtype=jnp.float32)

    # PyTorch-Linear-style init (uniform +/- 1/sqrt(fan_in)); w1/b1/w2 are the
    # torch parameters in (in, out) layout.
    bound1 = 1.0 / (D ** 0.5)
    w1 = jax.random.uniform(kw1, (D, H), jnp.float32, -bound1, bound1)
    b1 = jax.random.uniform(kb1, (1, H), jnp.float32, -bound1, bound1)
    bound2 = 1.0 / (H ** 0.5)
    w2 = jax.random.uniform(kw2, (H, 1), jnp.float32, -bound2, bound2)

    ref = semantic_attention_ref(z, w1, b1, w2)

    # Path 1: fused resident-z kernel (z fits in VMEM at these shapes).
    out_fused = jax.block_until_ready(semantic_attention(z, w1, b1, w2))
    assert out_fused.shape == (N, D)
    assert jnp.allclose(out_fused, ref, atol=1e-5, rtol=1e-5), \
        "fused path mismatch vs JAX reference"

    # Path 2: streaming two-pass kernels, forced with small tiles so the grid,
    # core-split and partial/phantom-tile masking are all exercised.
    out_stream = jax.block_until_ready(
        semantic_attention(z, w1, b1, w2, block_rows=64, force_streaming=True))
    assert out_stream.shape == (N, D)
    assert jnp.allclose(out_stream, ref, atol=1e-5, rtol=1e-5), \
        "streaming path mismatch vs JAX reference"

    print("KERNEL_OK")
</pallas_src>

<mosaic_0001>
module attributes {stable_mosaic.version = 11 : i64} {
  func.func @_fused_kernel(%arg0: i32, %arg1: memref<192x128xf32, #tpu.memory_space<vmem>>, %arg2: memref<128x128xf32, #tpu.memory_space<vmem>>, %arg3: memref<1x128xf32, #tpu.memory_space<vmem>>, %arg4: memref<128x4xf32, #tpu.memory_space<vmem>>, %arg5: memref<192x32xf32, #tpu.memory_space<vmem>>) attributes {dimension_semantics = [#tpu.dimension_semantics<arbitrary>], iteration_bounds = array<i64: 1>, scalar_prefetch = 0 : i64, scratch_operands = 0 : i64, tpu.core_type = #tpu.core_type<tc>, window_params = [{pipeline_mode = #tpu.pipeline_mode<synchronous>, transform_indices = @transform_0, window_bounds = array<i64: 192, 128>}, {pipeline_mode = #tpu.pipeline_mode<synchronous>, transform_indices = @transform_1, window_bounds = array<i64: 128, 128>}, {pipeline_mode = #tpu.pipeline_mode<synchronous>, transform_indices = @transform_2, window_bounds = array<i64: 1, 128>}, {pipeline_mode = #tpu.pipeline_mode<synchronous>, transform_indices = @transform_3, window_bounds = array<i64: 128, 4>}, {pipeline_mode = #tpu.pipeline_mode<synchronous>, transform_indices = @transform_4, window_bounds = array<i64: 192, 32>}]} {
    %c0 = arith.constant 0 : index
    %c0_0 = arith.constant 0 : index
    %0 = vector.load %arg1[%c0, %c0_0] : memref<192x128xf32, #tpu.memory_space<vmem>>, vector<192x128xf32>
    %c0_1 = arith.constant 0 : index
    %c0_2 = arith.constant 0 : index
    %1 = vector.load %arg2[%c0_1, %c0_2] : memref<128x128xf32, #tpu.memory_space<vmem>>, vector<128x128xf32>
    %cst = arith.constant dense<0.000000e+00> : vector<192x128xf32>
    %2 = tpu.matmul %0, %1, %cst {dimension_numbers = #tpu.dot_dimension_numbers<[1], [0], [0], [1], [0, 0, 1, 1], [], []>} : vector<192x128xf32>, vector<128x128xf32>, vector<192x128xf32> -> vector<192x128xf32>
    %c0_3 = arith.constant 0 : index
    %c0_4 = arith.constant 0 : index
    %3 = vector.load %arg3[%c0_3, %c0_4] : memref<1x128xf32, #tpu.memory_space<vmem>>, vector<1x128xf32>
    %4 = vector.broadcast %3 : vector<1x128xf32> to vector<192x128xf32>
    %5 = arith.addf %2, %4 : vector<192x128xf32>
    %6 = math.tanh %5 : vector<192x128xf32>
    %cst_5 = arith.constant dense<0.000000e+00> : vector<128xf32>
    %7 = vector.multi_reduction <add>, %6, %cst_5 [0] : vector<192x128xf32> to vector<128xf32>
    %8 = vector.shape_cast %7 : vector<128xf32> to vector<1x128xf32>
    %cst_6 = arith.constant 0.00520833349 : f32
    %9 = vector.broadcast %cst_6 : f32 to vector<1x128xf32>
    %10 = arith.mulf %8, %9 : vector<1x128xf32>
    %c0_7 = arith.constant 0 : index
    %c0_8 = arith.constant 0 : index
    %11 = vector.load %arg4[%c0_7, %c0_8] : memref<128x4xf32, #tpu.memory_space<vmem>>, vector<128x4xf32>
    %cst_9 = arith.constant dense<0.000000e+00> : vector<1x4xf32>
    %12 = tpu.matmul %10, %11, %cst_9 {dimension_numbers = #tpu.dot_dimension_numbers<[1], [0], [0], [1], [0, 0, 1, 1], [], []>} : vector<1x128xf32>, vector<128x4xf32>, vector<1x4xf32> -> vector<1x4xf32>
    %cst_10 = arith.constant dense<0xFF800000> : vector<1xf32>
    %13 = vector.multi_reduction <maximumf>, %12, %cst_10 [1] : vector<1x4xf32> to vector<1xf32>
    %14 = vector.shape_cast %13 : vector<1xf32> to vector<1x1xf32>
    %15 = vector.broadcast %14 : vector<1x1xf32> to vector<1x4xf32>
    %16 = arith.subf %12, %15 : vector<1x4xf32>
    %17 = math.exp %16 : vector<1x4xf32>
    %cst_11 = arith.constant dense<0.000000e+00> : vector<1xf32>
    %18 = vector.multi_reduction <add>, %17, %cst_11 [1] : vector<1x4xf32> to vector<1xf32>
    %19 = vector.shape_cast %18 : vector<1xf32> to vector<1x1xf32>
    %20 = vector.broadcast %19 : vector<1x1xf32> to vector<1x4xf32>
    %21 = arith.divf %17, %20 : vector<1x4xf32>
    %22 = vector.extract_strided_slice %0 {offsets = [0, 0], sizes = [192, 32], strides = [1, 1]} : vector<192x128xf32> to vector<192x32xf32>
    %23 = vector.extract_strided_slice %21 {offsets = [0, 0], sizes = [1, 1], strides = [1, 1]} : vector<1x4xf32> to vector<1x1xf32>
    %24 = vector.broadcast %23 : vector<1x1xf32> to vector<192x32xf32>
    %25 = arith.mulf %22, %24 : vector<192x32xf32>
    %26 = vector.extract_strided_slice %0 {offsets = [0, 32], sizes = [192, 32], strides = [1, 1]} : vector<192x128xf32> to vector<192x32xf32>
    %27 = vector.extract_strided_slice %21 {offsets = [0, 1], sizes = [1, 1], strides = [1, 1]} : vector<1x4xf32> to vector<1x1xf32>
    %28 = vector.broadcast %27 : vector<1x1xf32> to vector<192x32xf32>
    %29 = arith.mulf %26, %28 : vector<192x32xf32>
    %30 = arith.addf %25, %29 : vector<192x32xf32>
    %31 = vector.extract_strided_slice %0 {offsets = [0, 64], sizes = [192, 32], strides = [1, 1]} : vector<192x128xf32> to vector<192x32xf32>
    %32 = vector.extract_strided_slice %21 {offsets = [0, 2], sizes = [1, 1], strides = [1, 1]} : vector<1x4xf32> to vector<1x1xf32>
    %33 = vector.broadcast %32 : vector<1x1xf32> to vector<192x32xf32>
    %34 = arith.mulf %31, %33 : vector<192x32xf32>
    %35 = arith.addf %30, %34 : vector<192x32xf32>
    %36 = vector.extract_strided_slice %0 {offsets = [0, 96], sizes = [192, 32], strides = [1, 1]} : vector<192x128xf32> to vector<192x32xf32>
    %37 = vector.extract_strided_slice %21 {offsets = [0, 3], sizes = [1, 1], strides = [1, 1]} : vector<1x4xf32> to vector<1x1xf32>
    %38 = vector.broadcast %37 : vector<1x1xf32> to vector<192x32xf32>
    %39 = arith.mulf %36, %38 : vector<192x32xf32>
    %40 = arith.addf %35, %39 : vector<192x32xf32>
    %c0_12 = arith.constant 0 : index
    %c0_13 = arith.constant 0 : index
    %41 = vector.load %arg5[%c0_12, %c0_13] : memref<192x32xf32, #tpu.memory_space<vmem>>, vector<192x32xf32>
    tpu.vector_store %arg5[%c0_12, %c0_13], %40 {strides = array<i32>} : memref<192x32xf32, #tpu.memory_space<vmem>>, vector<192x32xf32>,
    return
  }
  func.func @transform_0(%arg0: i32) -> (i32, i32) {
    %c0_i32 = arith.constant 0 : i32
    %c0_i32_0 = arith.constant 0 : i32
    %c0_i32_1 = arith.constant 0 : i32
    return %c0_i32, %c0_i32_0 : i32, i32
  }
  func.func @transform_1(%arg0: i32) -> (i32, i32) {
    %c0_i32 = arith.constant 0 : i32
    %c0_i32_0 = arith.constant 0 : i32
    %c0_i32_1 = arith.constant 0 : i32
    return %c0_i32, %c0_i32_0 : i32, i32
  }
  func.func @transform_2(%arg0: i32) -> (i32, i32) {
    %c0_i32 = arith.constant 0 : i32
    %c0_i32_0 = arith.constant 0 : i32
    %c0_i32_1 = arith.constant 0 : i32
    return %c0_i32, %c0_i32_0 : i32, i32
  }
  func.func @transform_3(%arg0: i32) -> (i32, i32) {
    %c0_i32 = arith.constant 0 : i32
    %c0_i32_0 = arith.constant 0 : i32
    %c0_i32_1 = arith.constant 0 : i32
    return %c0_i32, %c0_i32_0 : i32, i32
  }
  func.func @transform_4(%arg0: i32) -> (i32, i32) {
    %c0_i32 = arith.constant 0 : i32
    %c0_i32_0 = arith.constant 0 : i32
    %c0_i32_1 = arith.constant 0 : i32
    return %c0_i32, %c0_i32_0 : i32, i32
  }
}

</mosaic_0001>

<llo_original>
// kernel: tpu_custom_call.1
$region0: #{tpu_custom_call.1}
  #allocation0 [shape = 'u32[]', space=smem, size = 0x4, offset = 0x4, fixed_abs, tag = 'smem constant byte address 0x4 - core index']
  #allocation1 [shape = 'u32[144,128]{1,0:T(1,128)}', space=vmem, size = 0x12000, scoped, tag = 'internal scratch']
  %s0 = inlined_call_operand.hbm [shape: f32[192,128], index: 0, kind: input, shape index: {}]
  %s1 = inlined_call_operand.vmem [shape: f32[128,128], index: 1, kind: input, shape index: {}]
  %s2 = inlined_call_operand.vmem [shape: f32[1,128], index: 2, kind: input, shape index: {}]
  %s3 = inlined_call_operand.vmem [shape: f32[128,4], index: 3, kind: input, shape index: {}]
  %s4 = inlined_call_operand.vmem [shape: f32[192,32], index: 4, kind: output, shape index: {}]
  %s5 = sld [smem:[#allocation0]]
  $region30: #{tpu_custom_call.1} parent=0
    _
  %s7 = ssub.s32 1, %s5
  %s8 = scalar_select 0, %s7, %s5
  $region1: #{tpu_custom_call.1} parent=0
    #allocation2 [shape = 'u8[98304]{0}', space=vmem, size = 0x18000, scoped, tag = 'input window, operand 0, single buffered']
    #allocation3 [shape = 's32[1]{0}', space=sflag, size = 0x4, scoped, tag = 'scoped memory for tpu_custom_call.1']
    %9 = vsyncpa [#allocation3], 0
    // Predicated region
    $region2: #{tpu_custom_call.1} parent=1 // pred_check
      _
    $region3: #{tpu_custom_call.1} parent=1 // pred_check_branch
      %11 = sbr.rel (0) target = $region5
    $region4: #{tpu_custom_call.1} parent=1 // pred_region
      %s13 = ssub.s32 3072, 3072
      %14 = vsyncadd [#allocation3], %s13
      %s15 = sshll.u32 [#allocation2], 4
      %s16 = int_to_ptr.vmem [resolvable:$true] %s15
      %21 = dma.hbm_to_vmem [thread:$0]  %s0, 3072, %s16, [#allocation3], 128, 128, 8
    $region5: #{tpu_custom_call.1} parent=1 // pred_fallthru
      _
    // Predicated region
    $region6: #{tpu_custom_call.1} parent=1 // pred_check
      _
    $region7: #{tpu_custom_call.1} parent=1 // pred_check_branch
      %23 = sbr.rel (0) target = $region9
    $region8: #{tpu_custom_call.1} parent=1 // pred_region
      _
    $region9: #{tpu_custom_call.1} parent=1 // pred_fallthru
      _
    // Predicated region
    $region10: #{tpu_custom_call.1} parent=1 // pred_check
      _
    $region11: #{tpu_custom_call.1} parent=1 // pred_check_branch
      %25 = sbr.rel (0) target = $region13
    $region12: #{tpu_custom_call.1} parent=1 // pred_region
      _
    $region13: #{tpu_custom_call.1} parent=1 // pred_fallthru
      _
    // Predicated region
    $region14: #{tpu_custom_call.1} parent=1 // pred_check
      _
    $region15: #{tpu_custom_call.1} parent=1 // pred_check_branch
      %27 = sbr.rel (0) target = $region17
    $region16: #{tpu_custom_call.1} parent=1 // pred_region
      _
    $region17: #{tpu_custom_call.1} parent=1 // pred_fallthru
      _
    // Predicated region
    $region18: #{tpu_custom_call.1} parent=1 // pred_check
      _
    $region19: #{tpu_custom_call.1} parent=1 // pred_check_branch
      %29 = sbr.rel (0) target = $region21
    $region20: #{tpu_custom_call.1} parent=1 // pred_region
      %30 = dma.done [#allocation3], 3072
    $region21: #{tpu_custom_call.1} parent=1 // pred_fallthru
      _
    %v31 = vld [vmem:[#allocation2] sm:$0xff]
    %v32 = vld [vmem:[#allocation2 + $0x8] sm:$0xff]
    %v33 = vld [vmem:[#allocation2 + $0x10] sm:$0xff]
    %v34 = vld [vmem:[#allocation2 + $0x18] sm:$0xff]
    %v35 = vld [vmem:[#allocation2 + $0x20] sm:$0xff]
    %v36 = vld [vmem:[#allocation2 + $0x28] sm:$0xff]
    %v37 = vld [vmem:[#allocation2 + $0x30] sm:$0xff]
    %v38 = vld [vmem:[#allocation2 + $0x38] sm:$0xff]
    %v39 = vld [vmem:[#allocation2 + $0x40] sm:$0xff]
    %v40 = vld [vmem:[#allocation2 + $0x48] sm:$0xff]
    %v41 = vld [vmem:[#allocation2 + $0x50] sm:$0xff]
    %v42 = vld [vmem:[#allocation2 + $0x58] sm:$0xff]
    %v43 = vld [vmem:[#allocation2 + $0x60] sm:$0xff]
    %v44 = vld [vmem:[#allocation2 + $0x68] sm:$0xff]
    %v45 = vld [vmem:[#allocation2 + $0x70] sm:$0xff]
    %v46 = vld [vmem:[#allocation2 + $0x78] sm:$0xff]
    %v47 = vld [vmem:[#allocation2 + $0x80] sm:$0xff]
    %v48 = vld [vmem:[#allocation2 + $0x88] sm:$0xff]
    %v49 = vld [vmem:[#allocation2 + $0x90] sm:$0xff]
    %v50 = vld [vmem:[#allocation2 + $0x98] sm:$0xff]
    %v51 = vld [vmem:[#allocation2 + $0xa0] sm:$0xff]
    %v52 = vld [vmem:[#allocation2 + $0xa8] sm:$0xff]
    %v53 = vld [vmem:[#allocation2 + $0xb0] sm:$0xff]
    %v54 = vld [vmem:[#allocation2 + $0xb8] sm:$0xff]
    %v55 = vld [vmem:[%s1] sm:$0xff]
    %v56 = vld [vmem:[%s1 + $0x8] sm:$0xff]
    %v57 = vld [vmem:[%s1 + $0x10] sm:$0xff]
    %v58 = vld [vmem:[%s1 + $0x18] sm:$0xff]
    %v59 = vld [vmem:[%s1 + $0x20] sm:$0xff]
    %v60 = vld [vmem:[%s1 + $0x28] sm:$0xff]
    %v61 = vld [vmem:[%s1 + $0x30] sm:$0xff]
    %v62 = vld [vmem:[%s1 + $0x38] sm:$0xff]
    %v63 = vld [vmem:[%s1 + $0x40] sm:$0xff]
    %v64 = vld [vmem:[%s1 + $0x48] sm:$0xff]
    %v65 = vld [vmem:[%s1 + $0x50] sm:$0xff]
    %v66 = vld [vmem:[%s1 + $0x58] sm:$0xff]
    %v67 = vld [vmem:[%s1 + $0x60] sm:$0xff]
    %v68 = vld [vmem:[%s1 + $0x68] sm:$0xff]
    %v69 = vld [vmem:[%s1 + $0x70] sm:$0xff]
    %v70 = vld [vmem:[%s1 + $0x78] sm:$0xff]
    %v71 = vld [vmem:[%s2] sm:$0x1]
    %v73 = vlaneseq
    %v74 = vshrl.u32 %v73, 7
    %v75 = vsub.s32 0, %v74
    %v76 = vrot.slane %v71, %v75
    %78 = vmatprep.subr.mxu0 0.0
    %79 = vmatpush1.msra.mxu0 %v55
    %80 = vmatprep.subr.mxu0 0.0
    %81 = vmatpush1.msra.mxu0 %v56
    %82 = vmatprep.subr.mxu0 0.0
    %83 = vmatpush1.msra.mxu0 %v57
    %84 = vmatprep.subr.mxu0 0.0
    %85 = vmatpush1.msra.mxu0 %v58
    %86 = vmatprep.subr.mxu0 0.0
    %87 = vmatpush1.msra.mxu0 %v59
    %88 = vmatprep.subr.mxu0 0.0
    %89 = vmatpush1.msra.mxu0 %v60
    %90 = vmatprep.subr.mxu0 0.0
    %91 = vmatpush1.msra.mxu0 %v61
    %92 = vmatprep.subr.mxu0 0.0
    %93 = vmatpush1.msra.mxu0 %v62
    %94 = vmatprep.subr.mxu0 0.0
    %95 = vmatpush1.msra.mxu0 %v63
    %96 = vmatprep.subr.mxu0 0.0
    %97 = vmatpush1.msra.mxu0 %v64
    %98 = vmatprep.subr.mxu0 0.0
    %99 = vmatpush1.msra.mxu0 %v65
    %100 = vmatprep.subr.mxu0 0.0
    %101 = vmatpush1.msra.mxu0 %v66
    %102 = vmatprep.subr.mxu0 0.0
    %103 = vmatpush1.msra.mxu0 %v67
    %104 = vmatprep.subr.mxu0 0.0
    %105 = vmatpush1.msra.mxu0 %v68
    %106 = vmatprep.subr.mxu0 0.0
    %107 = vmatpush1.msra.mxu0 %v69
    %108 = vmatprep.subr.mxu0 0.0
    %109 = vmatpush1.msra.mxu0 %v70
    %110 = vmatprep.subr.mxu0 0.0
    %111 = vmatpush1.msra.mxu0 0.0
    %112 = vmatprep.subr.mxu0 0.0
    %113 = vmatpush1.msra.mxu0 0.0
    %114 = vmatprep.subr.mxu0 0.0
    %115 = vmatpush1.msra.mxu0 0.0
    %116 = vmatprep.subr.mxu0 0.0
    %117 = vmatpush1.msra.mxu0 0.0
    %118 = vmatprep.subr.mxu0 0.0
    %119 = vmatpush1.msra.mxu0 0.0
    %120 = vmatprep.subr.mxu0 0.0
    %121 = vmatpush1.msra.mxu0 0.0
    %122 = vmatprep.subr.mxu0 0.0
    %123 = vmatpush1.msra.mxu0 0.0
    %124 = vmatprep.subr.mxu0 0.0
    %125 = vmatpush1.msra.mxu0 0.0
    %126 = vmatprep.subr.mxu0 0.0
    %127 = vmatpush1.msra.mxu0 0.0
    %128 = vmatprep.subr.mxu0 0.0
    %129 = vmatpush1.msra.mxu0 0.0
    %130 = vmatprep.subr.mxu0 0.0
    %131 = vmatpush1.msra.mxu0 0.0
    %132 = vmatprep.subr.mxu0 0.0
    %133 = vmatpush1.msra.mxu0 0.0
    %134 = vmatprep.subr.mxu0 0.0
    %135 = vmatpush1.msra.mxu0 0.0
    %136 = vmatprep.subr.mxu0 0.0
    %137 = vmatpush1.msra.mxu0 0.0
    %138 = vmatprep.subr.mxu0 0.0
    %139 = vmatpush1.msra.mxu0 0.0
    %140 = vmatprep.subr.mxu0 0.0
    %141 = vmatpush1.msra.mxu0 0.0
    %142 = vmatprep.mubr.f32.mxu0 0.0
    %143 = vmatmul.mubr.f32.gmra.mrb[0].mxu0 %v31
    %v144 = vpop.f32.mrb[0].mxu0
    %v145 = vadd.f32 %v76, %v144
    %v146 = vpop.f32.mrb[0].mxu0
    %147 = vmatprep.mubr.f32.mxu0 0.0
    %148 = vmatmul.mubr.f32.gmra.mrb[0].mxu0 %v32
    %v149 = vpop.f32.mrb[0].mxu0
    %v150 = vadd.f32 %v76, %v149
    %v151 = vpop.f32.mrb[0].mxu0
    %152 = vmatprep.mubr.f32.mxu0 0.0
    %153 = vmatmul.mubr.f32.gmra.mrb[0].mxu0 %v33
    %v154 = vpop.f32.mrb[0].mxu0
    %v155 = vadd.f32 %v76, %v154
    %v156 = vpop.f32.mrb[0].mxu0
    %157 = vmatprep.mubr.f32.mxu0 0.0
    %158 = vmatmul.mubr.f32.gmra.mrb[0].mxu0 %v34
    %v159 = vpop.f32.mrb[0].mxu0
    %v160 = vadd.f32 %v76, %v159
    %v161 = vpop.f32.mrb[0].mxu0
    %162 = vmatprep.mubr.f32.mxu0 0.0
    %163 = vmatmul.mubr.f32.gmra.mrb[0].mxu0 %v35
    %v164 = vpop.f32.mrb[0].mxu0
    %v165 = vadd.f32 %v76, %v164
    %v166 = vpop.f32.mrb[0].mxu0
    %167 = vmatprep.mubr.f32.mxu0 0.0
    %168 = vmatmul.mubr.f32.gmra.mrb[0].mxu0 %v36
    %v169 = vpop.f32.mrb[0].mxu0
    %v170 = vadd.f32 %v76, %v169
    %v171 = vpop.f32.mrb[0].mxu0
    %172 = vmatprep.mubr.f32.mxu0 0.0
    %173 = vmatmul.mubr.f32.gmra.mrb[0].mxu0 %v37
    %v174 = vpop.f32.mrb[0].mxu0
    %v175 = vadd.f32 %v76, %v174
    %v176 = vpop.f32.mrb[0].mxu0
    %177 = vmatprep.mubr.f32.mxu0 0.0
    %178 = vmatmul.mubr.f32.gmra.mrb[0].mxu0 %v38
    %v179 = vpop.f32.mrb[0].mxu0
    %v180 = vadd.f32 %v76, %v179
    %v181 = vpop.f32.mrb[0].mxu0
    %182 = vmatprep.mubr.f32.mxu0 0.0
    %183 = vmatmul.mubr.f32.gmra.mrb[0].mxu0 %v39
    %v184 = vpop.f32.mrb[0].mxu0
    %v185 = vadd.f32 %v76, %v184
    %v186 = vpop.f32.mrb[0].mxu0
    %187 = vmatprep.mubr.f32.mxu0 0.0
    %188 = vmatmul.mubr.f32.gmra.mrb[0].mxu0 %v40
    %v189 = vpop.f32.mrb[0].mxu0
    %v190 = vadd.f32 %v76, %v189
    %v191 = vpop.f32.mrb[0].mxu0
    %192 = vmatprep.mubr.f32.mxu0 0.0
    %193 = vmatmul.mubr.f32.gmra.mrb[0].mxu0 %v41
    %v194 = vpop.f32.mrb[0].mxu0
    %v195 = vadd.f32 %v76, %v194
    %v196 = vpop.f32.mrb[0].mxu0
    %197 = vmatprep.mubr.f32.mxu0 0.0
    %198 = vmatmul.mubr.f32.gmra.mrb[0].mxu0 %v42
    %v199 = vpop.f32.mrb[0].mxu0
    %v200 = vadd.f32 %v76, %v199
    %v201 = vpop.f32.mrb[0].mxu0
    %202 = vmatprep.mubr.f32.mxu0 0.0
    %203 = vmatmul.mubr.f32.gmra.mrb[0].mxu0 %v43
    %v204 = vpop.f32.mrb[0].mxu0
    %v205 = vadd.f32 %v76, %v204
    %v206 = vpop.f32.mrb[0].mxu0
    %207 = vmatprep.mubr.f32.mxu0 0.0
    %208 = vmatmul.mubr.f32.gmra.mrb[0].mxu0 %v44
    %v209 = vpop.f32.mrb[0].mxu0
    %v210 = vadd.f32 %v76, %v209
    %v211 = vpop.f32.mrb[0].mxu0
    %212 = vmatprep.mubr.f32.mxu0 0.0
    %213 = vmatmul.mubr.f32.gmra.mrb[0].mxu0 %v45
    %v214 = vpop.f32.mrb[0].mxu0
    %v215 = vadd.f32 %v76, %v214
    %v216 = vpop.f32.mrb[0].mxu0
    %217 = vmatprep.mubr.f32.mxu0 0.0
    %218 = vmatmul.mubr.f32.gmra.mrb[0].mxu0 %v46
    %v219 = vpop.f32.mrb[0].mxu0
    %v220 = vadd.f32 %v76, %v219
    %v221 = vpop.f32.mrb[0].mxu0
    %222 = vmatprep.mubr.f32.mxu0 0.0
    %223 = vmatmul.mubr.f32.gmra.mrb[0].mxu0 %v47
    %v224 = vpop.f32.mrb[0].mxu0
    %v225 = vadd.f32 %v76, %v224
    %v226 = vpop.f32.mrb[0].mxu0
    %227 = vmatprep.mubr.f32.mxu0 0.0
    %228 = vmatmul.mubr.f32.gmra.mrb[0].mxu0 %v48
    %v229 = vpop.f32.mrb[0].mxu0
    %v230 = vadd.f32 %v76, %v229
    %v231 = vpop.f32.mrb[0].mxu0
    %232 = vmatprep.mubr.f32.mxu0 0.0
    %233 = vmatmul.mubr.f32.gmra.mrb[0].mxu0 %v49
    %v234 = vpop.f32.mrb[0].mxu0
    %v235 = vadd.f32 %v76, %v234
    %v236 = vpop.f32.mrb[0].mxu0
    %237 = vmatprep.mubr.f32.mxu0 0.0
    %238 = vmatmul.mubr.f32.gmra.mrb[0].mxu0 %v50
    %v239 = vpop.f32.mrb[0].mxu0
    %v240 = vadd.f32 %v76, %v239
    %v241 = vpop.f32.mrb[0].mxu0
    %242 = vmatprep.mubr.f32.mxu0 0.0
    %243 = vmatmul.mubr.f32.gmra.mrb[0].mxu0 %v51
    %v244 = vpop.f32.mrb[0].mxu0
    %v245 = vadd.f32 %v76, %v244
    %v246 = vpop.f32.mrb[0].mxu0
    %247 = vmatprep.mubr.f32.mxu0 0.0
    %248 = vmatmul.mubr.f32.gmra.mrb[0].mxu0 %v52
    %v249 = vpop.f32.mrb[0].mxu0
    %v250 = vadd.f32 %v76, %v249
    %v251 = vpop.f32.mrb[0].mxu0
    %252 = vmatprep.mubr.f32.mxu0 0.0
    %253 = vmatmul.mubr.f32.gmra.mrb[0].mxu0 %v53
    %v254 = vpop.f32.mrb[0].mxu0
    %v255 = vadd.f32 %v76, %v254
    %v256 = vpop.f32.mrb[0].mxu0
    %257 = vmatprep.mubr.f32.mxu0 0.0
    %258 = vmatmul.mubr.f32.gmra.mrb[0].mxu0 %v54
    %v259 = vpop.f32.mrb[0].mxu0
    %v260 = vadd.f32 %v76, %v259
    %v261 = vpop.f32.mrb[0].mxu0
    %262 = vdwg.mxu0
    %v263 = vtanh.pop %v145
    %v264 = vtanh.pop %v150
    %v265 = vtanh.pop %v155
    %v266 = vtanh.pop %v160
    %v267 = vtanh.pop %v165
    %v268 = vtanh.pop %v170
    %v269 = vtanh.pop %v175
    %v270 = vtanh.pop %v180
    %v271 = vtanh.pop %v185
    %v272 = vtanh.pop %v190
    %v273 = vtanh.pop %v195
    %v274 = vtanh.pop %v200
    %v275 = vtanh.pop %v205
    %v276 = vtanh.pop %v210
    %v277 = vtanh.pop %v215
    %v278 = vtanh.pop %v220
    %v279 = vtanh.pop %v225
    %v280 = vtanh.pop %v230
    %v281 = vtanh.pop %v235
    %v282 = vtanh.pop %v240
    %v283 = vtanh.pop %v245
    %v284 = vtanh.pop %v250
    %v285 = vtanh.pop %v255
    %v286 = vtanh.pop %v260
    %v287 = vadd.f32 %v263, %v264
    %v288 = vadd.f32 %v287, %v265
    %v289 = vadd.f32 %v288, %v266
    %v290 = vadd.f32 %v289, %v267
    %v291 = vadd.f32 %v290, %v268
    %v292 = vadd.f32 %v291, %v269
    %v293 = vadd.f32 %v292, %v270
    %v294 = vadd.f32 %v293, %v271
    %v295 = vadd.f32 %v294, %v272
    %v296 = vadd.f32 %v295, %v273
    %v297 = vadd.f32 %v296, %v274
    %v298 = vadd.f32 %v297, %v275
    %v299 = vadd.f32 %v298, %v276
    %v300 = vadd.f32 %v299, %v277
    %v301 = vadd.f32 %v300, %v278
    %v302 = vadd.f32 %v301, %v279
    %v303 = vadd.f32 %v302, %v280
    %v304 = vadd.f32 %v303, %v281
    %v305 = vadd.f32 %v304, %v282
    %v306 = vadd.f32 %v305, %v283
    %v307 = vadd.f32 %v306, %v284
    %v308 = vadd.f32 %v307, %v285
    %v309 = vadd.f32 %v308, %v286
    %v310 = vrot.slane %v309, 4
    %v311 = vadd.f32 %v309, %v310
    %v312 = vrot.slane %v311, 2
    %v313 = vadd.f32 %v311, %v312
    %v314 = vrot.slane %v313, 1
    %v315 = vadd.f32 %v313, %v314
    %v316 = vmul.f32 %v315, 0.0052083335
    %v317 = vld [vmem:[%s3] sm:$0xff]
    %v318 = vld [vmem:[%s3 + $0x8] sm:$0xff]
    %v319 = vld [vmem:[%s3 + $0x10] sm:$0xff]
    %v320 = vld [vmem:[%s3 + $0x18] sm:$0xff]
    %v321 = vld [vmem:[%s3 + $0x20] sm:$0xff]
    %v322 = vld [vmem:[%s3 + $0x28] sm:$0xff]
    %v323 = vld [vmem:[%s3 + $0x30] sm:$0xff]
    %v324 = vld [vmem:[%s3 + $0x38] sm:$0xff]
    %v325 = vld [vmem:[%s3 + $0x40] sm:$0xff]
    %v326 = vld [vmem:[%s3 + $0x48] sm:$0xff]
    %v327 = vld [vmem:[%s3 + $0x50] sm:$0xff]
    %v328 = vld [vmem:[%s3 + $0x58] sm:$0xff]
    %v329 = vld [vmem:[%s3 + $0x60] sm:$0xff]
    %v330 = vld [vmem:[%s3 + $0x68] sm:$0xff]
    %v331 = vld [vmem:[%s3 + $0x70] sm:$0xff]
    %v332 = vld [vmem:[%s3 + $0x78] sm:$0xff]
    %333 = vmatprep.subr.mxu0 0.0
    %334 = vmatpush1.msra.mxu0 %v317
    %335 = vmatprep.subr.mxu0 0.0
    %336 = vmatpush1.msra.mxu0 %v318
    %337 = vmatprep.subr.mxu0 0.0
    %338 = vmatpush1.msra.mxu0 %v319
    %339 = vmatprep.subr.mxu0 0.0
    %340 = vmatpush1.msra.mxu0 %v320
    %341 = vmatprep.subr.mxu0 0.0
    %342 = vmatpush1.msra.mxu0 %v321
    %343 = vmatprep.subr.mxu0 0.0
    %344 = vmatpush1.msra.mxu0 %v322
    %345 = vmatprep.subr.mxu0 0.0
    %346 = vmatpush1.msra.mxu0 %v323
    %347 = vmatprep.subr.mxu0 0.0
    %348 = vmatpush1.msra.mxu0 %v324
    %349 = vmatprep.subr.mxu0 0.0
    %350 = vmatpush1.msra.mxu0 %v325
    %351 = vmatprep.subr.mxu0 0.0
    %352 = vmatpush1.msra.mxu0 %v326
    %353 = vmatprep.subr.mxu0 0.0
    %354 = vmatpush1.msra.mxu0 %v327
    %355 = vmatprep.subr.mxu0 0.0
    %356 = vmatpush1.msra.mxu0 %v328
    %357 = vmatprep.subr.mxu0 0.0
    %358 = vmatpush1.msra.mxu0 %v329
    %359 = vmatprep.subr.mxu0 0.0
    %360 = vmatpush1.msra.mxu0 %v330
    %361 = vmatprep.subr.mxu0 0.0
    %362 = vmatpush1.msra.mxu0 %v331
    %363 = vmatprep.subr.mxu0 0.0
    %364 = vmatpush1.msra.mxu0 %v332
    %365 = vmatprep.subr.mxu0 0.0
    %366 = vmatpush1.msra.mxu0 0.0
    %367 = vmatprep.subr.mxu0 0.0
    %368 = vmatpush1.msra.mxu0 0.0
    %369 = vmatprep.subr.mxu0 0.0
    %370 = vmatpush1.msra.mxu0 0.0
    %371 = vmatprep.subr.mxu0 0.0
    %372 = vmatpush1.msra.mxu0 0.0
    %373 = vmatprep.subr.mxu0 0.0
    %374 = vmatpush1.msra.mxu0 0.0
    %375 = vmatprep.subr.mxu0 0.0
    %376 = vmatpush1.msra.mxu0 0.0
    %377 = vmatprep.subr.mxu0 0.0
    %378 = vmatpush1.msra.mxu0 0.0
    %379 = vmatprep.subr.mxu0 0.0
    %380 = vmatpush1.msra.mxu0 0.0
    %381 = vmatprep.subr.mxu0 0.0
    %382 = vmatpush1.msra.mxu0 0.0
    %383 = vmatprep.subr.mxu0 0.0
    %384 = vmatpush1.msra.mxu0 0.0
    %385 = vmatprep.subr.mxu0 0.0
    %386 = vmatpush1.msra.mxu0 0.0
    %387 = vmatprep.subr.mxu0 0.0
    %388 = vmatpush1.msra.mxu0 0.0
    %389 = vmatprep.subr.mxu0 0.0
    %390 = vmatpush1.msra.mxu0 0.0
    %391 = vmatprep.subr.mxu0 0.0
    %392 = vmatpush1.msra.mxu0 0.0
    %393 = vmatprep.subr.mxu0 0.0
    %394 = vmatpush1.msra.mxu0 0.0
    %395 = vmatprep.subr.mxu0 0.0
    %396 = vmatpush1.msra.mxu0 0.0
    %397 = vmatprep.mubr.f32.mxu0 0.0
    %398 = vmatmul.mubr.f32.gmra.mrb[0].mxu0 %v316
    %v399 = vpop.f32.mrb[0].mxu0
    %v400 = vadd.f32 0.0, %v399
    %v401 = vpop.f32.mrb[0].mxu0
    %402 = vdwg.mxu0
    %vm403 = vcmask 24576
    %v404 = vsel %vm403, %v400, -inf
    %405 = vmax.xlane.f32.xlu0 %v404
    %v406 = vpop.xlane.xlu0 %405
    %v407 = vsub.f32 %v400, %v406
    %v408 = vmul.f32 %v407, 1.442695
    %v409 = vpow.pop %v408
    %v410 = vsel %vm403, %v409, 0.0
    %411 = vadd.xlane.f32.xlu0 %v410
    %v412 = vpop.xlane.xlu0 %411
    %v413 = vrcp.pop %v412
    %v414 = vmul.f32 %v409, %v413
    %s416 = vtos %v414
    %v417 = vstv %s416
    %v419 = vmul.f32 %v31, %v417
    %v420 = vmul.f32 %v32, %v417
    %v421 = vmul.f32 %v33, %v417
    %v422 = vmul.f32 %v34, %v417
    %v423 = vmul.f32 %v35, %v417
    %v424 = vmul.f32 %v36, %v417
    %v425 = vmul.f32 %v37, %v417
    %v426 = vmul.f32 %v38, %v417
    %v427 = vmul.f32 %v39, %v417
    %v428 = vmul.f32 %v40, %v417
    %v429 = vmul.f32 %v41, %v417
    %v430 = vmul.f32 %v42, %v417
    %v431 = vmul.f32 %v43, %v417
    %v432 = vmul.f32 %v44, %v417
    %v433 = vmul.f32 %v45, %v417
    %v434 = vmul.f32 %v46, %v417
    %v435 = vmul.f32 %v47, %v417
    %v436 = vmul.f32 %v48, %v417
    %v437 = vmul.f32 %v49, %v417
    %v438 = vmul.f32 %v50, %v417
    %v439 = vmul.f32 %v51, %v417
    %v440 = vmul.f32 %v52, %v417
    %v441 = vmul.f32 %v53, %v417
    %v442 = vmul.f32 %v54, %v417
    %443 = vrot.lane.b32.xlu0 %v414, 127
    %v444 = vpop.permute.xlu0 %443
    %s445 = vtos %v444
    %v446 = vstv %s445
    %v448 = vmul.f32 %v31, %v446
    %v449 = vmul.f32 %v32, %v446
    %v450 = vmul.f32 %v33, %v446
    %v451 = vmul.f32 %v34, %v446
    %v452 = vmul.f32 %v35, %v446
    %v453 = vmul.f32 %v36, %v446
    %v454 = vmul.f32 %v37, %v446
    %v455 = vmul.f32 %v38, %v446
    %v456 = vmul.f32 %v39, %v446
    %v457 = vmul.f32 %v40, %v446
    %v458 = vmul.f32 %v41, %v446
    %v459 = vmul.f32 %v42, %v446
    %v460 = vmul.f32 %v43, %v446
    %v461 = vmul.f32 %v44, %v446
    %v462 = vmul.f32 %v45, %v446
    %v463 = vmul.f32 %v46, %v446
    %v464 = vmul.f32 %v47, %v446
    %v465 = vmul.f32 %v48, %v446
    %v466 = vmul.f32 %v49, %v446
    %v467 = vmul.f32 %v50, %v446
    %v468 = vmul.f32 %v51, %v446
    %v469 = vmul.f32 %v52, %v446
    %v470 = vmul.f32 %v53, %v446
    %v471 = vmul.f32 %v54, %v446
    %496 = vrot.lane.b32.xlu0 %v448, 96
    %v497 = vpop.permute.xlu0 %496
    %498 = vrot.lane.b32.xlu0 %v449, 96
    %v499 = vpop.permute.xlu0 %498
    %500 = vrot.lane.b32.xlu0 %v450, 96
    %v501 = vpop.permute.xlu0 %500
    %502 = vrot.lane.b32.xlu0 %v451, 96
    %v503 = vpop.permute.xlu0 %502
    %504 = vrot.lane.b32.xlu0 %v452, 96
    %v505 = vpop.permute.xlu0 %504
    %506 = vrot.lane.b32.xlu0 %v453, 96
    %v507 = vpop.permute.xlu0 %506
    %508 = vrot.lane.b32.xlu0 %v454, 96
    %v509 = vpop.permute.xlu0 %508
    %510 = vrot.lane.b32.xlu0 %v455, 96
    %v511 = vpop.permute.xlu0 %510
    %512 = vrot.lane.b32.xlu0 %v456, 96
    %v513 = vpop.permute.xlu0 %512
    %514 = vrot.lane.b32.xlu0 %v457, 96
    %v515 = vpop.permute.xlu0 %514
    %516 = vrot.lane.b32.xlu0 %v458, 96
    %v517 = vpop.permute.xlu0 %516
    %518 = vrot.lane.b32.xlu0 %v459, 96
    %v519 = vpop.permute.xlu0 %518
    %520 = vrot.lane.b32.xlu0 %v460, 96
    %v521 = vpop.permute.xlu0 %520
    %522 = vrot.lane.b32.xlu0 %v461, 96
    %v523 = vpop.permute.xlu0 %522
    %524 = vrot.lane.b32.xlu0 %v462, 96
    %v525 = vpop.permute.xlu0 %524
    %526 = vrot.lane.b32.xlu0 %v463, 96
    %v527 = vpop.permute.xlu0 %526
    %528 = vrot.lane.b32.xlu0 %v464, 96
    %v529 = vpop.permute.xlu0 %528
    %530 = vrot.lane.b32.xlu0 %v465, 96
    %v531 = vpop.permute.xlu0 %530
    %532 = vrot.lane.b32.xlu0 %v466, 96
    %v533 = vpop.permute.xlu0 %532
    %534 = vrot.lane.b32.xlu0 %v467, 96
    %v535 = vpop.permute.xlu0 %534
    %536 = vrot.lane.b32.xlu0 %v468, 96
    %v537 = vpop.permute.xlu0 %536
    %538 = vrot.lane.b32.xlu0 %v469, 96
    %v539 = vpop.permute.xlu0 %538
    %540 = vrot.lane.b32.xlu0 %v470, 96
    %v541 = vpop.permute.xlu0 %540
    %542 = vrot.lane.b32.xlu0 %v471, 96
    %v543 = vpop.permute.xlu0 %542
    %v568 = vadd.f32 %v419, %v497
    %v569 = vadd.f32 %v420, %v499
    %v570 = vadd.f32 %v421, %v501
    %v571 = vadd.f32 %v422, %v503
    %v572 = vadd.f32 %v423, %v505
    %v573 = vadd.f32 %v424, %v507
    %v574 = vadd.f32 %v425, %v509
    %v575 = vadd.f32 %v426, %v511
    %v576 = vadd.f32 %v427, %v513
    %v577 = vadd.f32 %v428, %v515
    %v578 = vadd.f32 %v429, %v517
    %v579 = vadd.f32 %v430, %v519
    %v580 = vadd.f32 %v431, %v521
    %v581 = vadd.f32 %v432, %v523
    %v582 = vadd.f32 %v433, %v525
    %v583 = vadd.f32 %v434, %v527
    %v584 = vadd.f32 %v435, %v529
    %v585 = vadd.f32 %v436, %v531
    %v586 = vadd.f32 %v437, %v533
    %v587 = vadd.f32 %v438, %v535
    %v588 = vadd.f32 %v439, %v537
    %v589 = vadd.f32 %v440, %v539
    %v590 = vadd.f32 %v441, %v541
    %v591 = vadd.f32 %v442, %v543
    %592 = vrot.lane.b32.xlu0 %v414, 126
    %v593 = vpop.permute.xlu0 %592
    %s594 = vtos %v593
    %v595 = vstv %s594
    %v597 = vmul.f32 %v31, %v595
    %v598 = vmul.f32 %v32, %v595
    %v599 = vmul.f32 %v33, %v595
    %v600 = vmul.f32 %v34, %v595
    %v601 = vmul.f32 %v35, %v595
    %v602 = vmul.f32 %v36, %v595
    %v603 = vmul.f32 %v37, %v595
    %v604 = vmul.f32 %v38, %v595
    %v605 = vmul.f32 %v39, %v595
    %v606 = vmul.f32 %v40, %v595
    %v607 = vmul.f32 %v41, %v595
    %v608 = vmul.f32 %v42, %v595
    %v609 = vmul.f32 %v43, %v595
    %v610 = vmul.f32 %v44, %v595
    %v611 = vmul.f32 %v45, %v595
    %v612 = vmul.f32 %v46, %v595
    %v613 = vmul.f32 %v47, %v595
    %v614 = vmul.f32 %v48, %v595
    %v615 = vmul.f32 %v49, %v595
    %v616 = vmul.f32 %v50, %v595
    %v617 = vmul.f32 %v51, %v595
    %v618 = vmul.f32 %v52, %v595
    %v619 = vmul.f32 %v53, %v595
    %v620 = vmul.f32 %v54, %v595
    %645 = vrot.lane.b32.xlu0 %v597, 64
    %v646 = vpop.permute.xlu0 %645
    %647 = vrot.lane.b32.xlu0 %v598, 64
    %v648 = vpop.permute.xlu0 %647
    %649 = vrot.lane.b32.xlu0 %v599, 64
    %v650 = vpop.permute.xlu0 %649
    %651 = vrot.lane.b32.xlu0 %v600, 64
    %v652 = vpop.permute.xlu0 %651
    %653 = vrot.lane.b32.xlu0 %v601, 64
    %v654 = vpop.permute.xlu0 %653
    %655 = vrot.lane.b32.xlu0 %v602, 64
    %v656 = vpop.permute.xlu0 %655
    %657 = vrot.lane.b32.xlu0 %v603, 64
    %v658 = vpop.permute.xlu0 %657
    %659 = vrot.lane.b32.xlu0 %v604, 64
    %v660 = vpop.permute.xlu0 %659
    %661 = vrot.lane.b32.xlu0 %v605, 64
    %v662 = vpop.permute.xlu0 %661
    %663 = vrot.lane.b32.xlu0 %v606, 64
    %v664 = vpop.permute.xlu0 %663
    %665 = vrot.lane.b32.xlu0 %v607, 64
    %v666 = vpop.permute.xlu0 %665
    %667 = vrot.lane.b32.xlu0 %v608, 64
    %v668 = vpop.permute.xlu0 %667
    %669 = vrot.lane.b32.xlu0 %v609, 64
    %v670 = vpop.permute.xlu0 %669
    %671 = vrot.lane.b32.xlu0 %v610, 64
    %v672 = vpop.permute.xlu0 %671
    %673 = vrot.lane.b32.xlu0 %v611, 64
    %v674 = vpop.permute.xlu0 %673
    %675 = vrot.lane.b32.xlu0 %v612, 64
    %v676 = vpop.permute.xlu0 %675
    %677 = vrot.lane.b32.xlu0 %v613, 64
    %v678 = vpop.permute.xlu0 %677
    %679 = vrot.lane.b32.xlu0 %v614, 64
    %v680 = vpop.permute.xlu0 %679
    %681 = vrot.lane.b32.xlu0 %v615, 64
    %v682 = vpop.permute.xlu0 %681
    %683 = vrot.lane.b32.xlu0 %v616, 64
    %v684 = vpop.permute.xlu0 %683
    %685 = vrot.lane.b32.xlu0 %v617, 64
    %v686 = vpop.permute.xlu0 %685
    %687 = vrot.lane.b32.xlu0 %v618, 64
    %v688 = vpop.permute.xlu0 %687
    %689 = vrot.lane.b32.xlu0 %v619, 64
    %v690 = vpop.permute.xlu0 %689
    %691 = vrot.lane.b32.xlu0 %v620, 64
    %v692 = vpop.permute.xlu0 %691
    %v717 = vadd.f32 %v568, %v646
    %v718 = vadd.f32 %v569, %v648
    %v719 = vadd.f32 %v570, %v650
    %v720 = vadd.f32 %v571, %v652
    %v721 = vadd.f32 %v572, %v654
    %v722 = vadd.f32 %v573, %v656
    %v723 = vadd.f32 %v574, %v658
    %v724 = vadd.f32 %v575, %v660
    %v725 = vadd.f32 %v576, %v662
    %v726 = vadd.f32 %v577, %v664
    %v727 = vadd.f32 %v578, %v666
    %v728 = vadd.f32 %v579, %v668
    %v729 = vadd.f32 %v580, %v670
    %v730 = vadd.f32 %v581, %v672
    %v731 = vadd.f32 %v582, %v674
    %v732 = vadd.f32 %v583, %v676
    %v733 = vadd.f32 %v584, %v678
    %v734 = vadd.f32 %v585, %v680
    %v735 = vadd.f32 %v586, %v682
    %v736 = vadd.f32 %v587, %v684
    %v737 = vadd.f32 %v588, %v686
    %v738 = vadd.f32 %v589, %v688
    %v739 = vadd.f32 %v590, %v690
    %v740 = vadd.f32 %v591, %v692
    %741 = vrot.lane.b32.xlu0 %v414, 125
    %v742 = vpop.permute.xlu0 %741
    %s743 = vtos %v742
    %v744 = vstv %s743
    %v746 = vmul.f32 %v31, %v744
    %v747 = vmul.f32 %v32, %v744
    %v748 = vmul.f32 %v33, %v744
    %v749 = vmul.f32 %v34, %v744
    %v750 = vmul.f32 %v35, %v744
    %v751 = vmul.f32 %v36, %v744
    %v752 = vmul.f32 %v37, %v744
    %v753 = vmul.f32 %v38, %v744
    %v754 = vmul.f32 %v39, %v744
    %v755 = vmul.f32 %v40, %v744
    %v756 = vmul.f32 %v41, %v744
    %v757 = vmul.f32 %v42, %v744
    %v758 = vmul.f32 %v43, %v744
    %v759 = vmul.f32 %v44, %v744
    %v760 = vmul.f32 %v45, %v744
    %v761 = vmul.f32 %v46, %v744
    %v762 = vmul.f32 %v47, %v744
    %v763 = vmul.f32 %v48, %v744
    %v764 = vmul.f32 %v49, %v744
    %v765 = vmul.f32 %v50, %v744
    %v766 = vmul.f32 %v51, %v744
    %v767 = vmul.f32 %v52, %v744
    %v768 = vmul.f32 %v53, %v744
    %v769 = vmul.f32 %v54, %v744
    %794 = vrot.lane.b32.xlu0 %v746, 32
    %v795 = vpop.permute.xlu0 %794
    %796 = vrot.lane.b32.xlu0 %v747, 32
    %v797 = vpop.permute.xlu0 %796
    %798 = vrot.lane.b32.xlu0 %v748, 32
    %v799 = vpop.permute.xlu0 %798
    %800 = vrot.lane.b32.xlu0 %v749, 32
    %v801 = vpop.permute.xlu0 %800
    %802 = vrot.lane.b32.xlu0 %v750, 32
    %v803 = vpop.permute.xlu0 %802
    %804 = vrot.lane.b32.xlu0 %v751, 32
    %v805 = vpop.permute.xlu0 %804
    %806 = vrot.lane.b32.xlu0 %v752, 32
    %v807 = vpop.permute.xlu0 %806
    %808 = vrot.lane.b32.xlu0 %v753, 32
    %v809 = vpop.permute.xlu0 %808
    %810 = vrot.lane.b32.xlu0 %v754, 32
    %v811 = vpop.permute.xlu0 %810
    %812 = vrot.lane.b32.xlu0 %v755, 32
    %v813 = vpop.permute.xlu0 %812
    %814 = vrot.lane.b32.xlu0 %v756, 32
    %v815 = vpop.permute.xlu0 %814
    %816 = vrot.lane.b32.xlu0 %v757, 32
    %v817 = vpop.permute.xlu0 %816
    %818 = vrot.lane.b32.xlu0 %v758, 32
    %v819 = vpop.permute.xlu0 %818
    %820 = vrot.lane.b32.xlu0 %v759, 32
    %v821 = vpop.permute.xlu0 %820
    %822 = vrot.lane.b32.xlu0 %v760, 32
    %v823 = vpop.permute.xlu0 %822
    %824 = vrot.lane.b32.xlu0 %v761, 32
    %v825 = vpop.permute.xlu0 %824
    %826 = vrot.lane.b32.xlu0 %v762, 32
    %v827 = vpop.permute.xlu0 %826
    %828 = vrot.lane.b32.xlu0 %v763, 32
    %v829 = vpop.permute.xlu0 %828
    %830 = vrot.lane.b32.xlu0 %v764, 32
    %v831 = vpop.permute.xlu0 %830
    %832 = vrot.lane.b32.xlu0 %v765, 32
    %v833 = vpop.permute.xlu0 %832
    %834 = vrot.lane.b32.xlu0 %v766, 32
    %v835 = vpop.permute.xlu0 %834
    %836 = vrot.lane.b32.xlu0 %v767, 32
    %v837 = vpop.permute.xlu0 %836
    %838 = vrot.lane.b32.xlu0 %v768, 32
    %v839 = vpop.permute.xlu0 %838
    %840 = vrot.lane.b32.xlu0 %v769, 32
    %v841 = vpop.permute.xlu0 %840
    %v866 = vadd.f32 %v717, %v795
    %v867 = vadd.f32 %v718, %v797
    %v868 = vadd.f32 %v719, %v799
    %v869 = vadd.f32 %v720, %v801
    %v870 = vadd.f32 %v721, %v803
    %v871 = vadd.f32 %v722, %v805
    %v872 = vadd.f32 %v723, %v807
    %v873 = vadd.f32 %v724, %v809
    %v874 = vadd.f32 %v725, %v811
    %v875 = vadd.f32 %v726, %v813
    %v876 = vadd.f32 %v727, %v815
    %v877 = vadd.f32 %v728, %v817
    %v878 = vadd.f32 %v729, %v819
    %v879 = vadd.f32 %v730, %v821
    %v880 = vadd.f32 %v731, %v823
    %v881 = vadd.f32 %v732, %v825
    %v882 = vadd.f32 %v733, %v827
    %v883 = vadd.f32 %v734, %v829
    %v884 = vadd.f32 %v735, %v831
    %v885 = vadd.f32 %v736, %v833
    %v886 = vadd.f32 %v737, %v835
    %v887 = vadd.f32 %v738, %v837
    %v888 = vadd.f32 %v739, %v839
    %v889 = vadd.f32 %v740, %v841
    %vm890 = vcmask 261120
    %891 = vst.msk [vmem:[%s4] sm:$0xff] %vm890, %v866
    %892 = vst.msk [vmem:[%s4 + $0x8] sm:$0xff] %vm890, %v867
    %893 = vst.msk [vmem:[%s4 + $0x10] sm:$0xff] %vm890, %v868
    %894 = vst.msk [vmem:[%s4 + $0x18] sm:$0xff] %vm890, %v869
    %895 = vst.msk [vmem:[%s4 + $0x20] sm:$0xff] %vm890, %v870
    %896 = vst.msk [vmem:[%s4 + $0x28] sm:$0xff] %vm890, %v871
    %897 = vst.msk [vmem:[%s4 + $0x30] sm:$0xff] %vm890, %v872
    %898 = vst.msk [vmem:[%s4 + $0x38] sm:$0xff] %vm890, %v873
    %899 = vst.msk [vmem:[%s4 + $0x40] sm:$0xff] %vm890, %v874
    %900 = vst.msk [vmem:[%s4 + $0x48] sm:$0xff] %vm890, %v875
    %901 = vst.msk [vmem:[%s4 + $0x50] sm:$0xff] %vm890, %v876
    %902 = vst.msk [vmem:[%s4 + $0x58] sm:$0xff] %vm890, %v877
    %903 = vst.msk [vmem:[%s4 + $0x60] sm:$0xff] %vm890, %v878
    %904 = vst.msk [vmem:[%s4 + $0x68] sm:$0xff] %vm890, %v879
    %905 = vst.msk [vmem:[%s4 + $0x70] sm:$0xff] %vm890, %v880
    %906 = vst.msk [vmem:[%s4 + $0x78] sm:$0xff] %vm890, %v881
    %907 = vst.msk [vmem:[%s4 + $0x80] sm:$0xff] %vm890, %v882
    %908 = vst.msk [vmem:[%s4 + $0x88] sm:$0xff] %vm890, %v883
    %909 = vst.msk [vmem:[%s4 + $0x90] sm:$0xff] %vm890, %v884
    %910 = vst.msk [vmem:[%s4 + $0x98] sm:$0xff] %vm890, %v885
    %911 = vst.msk [vmem:[%s4 + $0xa0] sm:$0xff] %vm890, %v886
    %912 = vst.msk [vmem:[%s4 + $0xa8] sm:$0xff] %vm890, %v887
    %913 = vst.msk [vmem:[%s4 + $0xb0] sm:$0xff] %vm890, %v888
    %914 = vst.msk [vmem:[%s4 + $0xb8] sm:$0xff] %vm890, %v889
    // Predicated region
    $region22: #{tpu_custom_call.1} parent=1 // pred_check
      _
    $region23: #{tpu_custom_call.1} parent=1 // pred_check_branch
      %916 = sbr.rel (0) target = $region25
    $region24: #{tpu_custom_call.1} parent=1 // pred_region
      _
    $region25: #{tpu_custom_call.1} parent=1 // pred_fallthru
      _
    // Predicated region
    $region26: #{tpu_custom_call.1} parent=1 // pred_check
      _
    $region27: #{tpu_custom_call.1} parent=1 // pred_check_branch
      %918 = sbr.rel (0) target = $region29
    $region28: #{tpu_custom_call.1} parent=1 // pred_region
      _
    $region29: #{tpu_custom_call.1} parent=1 // pred_fallthru
      _
    %919 = vsyncpa [#allocation3], 1

</llo_original>
